<compile_context>
chip_gen: v7x
topology: tpu7x:2x2x1
jax: 0.10.0
libtpu: 0.0.40
codegen_flags: <defaults>
</compile_context>

<pallas_src>
import functools

import jax
import jax.numpy as jnp
import numpy as np
from jax import lax
from jax.experimental import pallas as pl
from jax.experimental.pallas import tpu as pltpu

LANES = 128
SUB = 8                         # sublanes per f32 vreg
ROWS_PER_ITER = 32              # rows per inner-loop step (4 vregs / stream in flight)
MAX_BLOCK_ROWS = 8192           # up to 8192 x 128 f32 = 4 MiB / stream / pipeline buffer
NUM_PARALLEL_CHUNKS = 2         # leading "parallel" grid axis (both v7x TensorCores)
PAD_LOGIT = -1.0e4              # finite in f16/bf16/f32; exp(-1e4)==0 and tanh(-5e3)==-1
                                # exactly -> BCE and sigmoid are exactly 0 on padding.

# accumulator slots (quantities)
_POS, _NEG, _BCE_POS, _BCE_NEG, _INTER, _SIG_SUM, _TGT_SUM = range(7)
_NUM_SUMS = 7


def _cdiv(a, b):
    return (a + b - 1) // b


def _round_up(a, b):
    return _cdiv(a, b) * b


def _partial_sums_kernel(*refs, shared_logits, block_rows):
    """Accumulates the 7 partial sums needed by BoundaryDiceLoss.

    refs = (bce_logits, [dice_logits,] target, out, acc):
      bce_logits  : NHWC-flattened logits (BCE branch), native dtype
      dice_logits : NCHW-flattened logits (Dice branch; omitted when shared_logits)
      target      : NCHW-flattened target, native dtype
      out         : (7, 8, 128) partial-sum slab for this parallel chunk
      acc         : persistent (7, 8, 128) f32 VMEM accumulator
    """
    if shared_logits:
        xb_ref, t_ref, out_ref, acc_ref = refs
    else:
        xb_ref, xd_ref, t_ref, out_ref, acc_ref = refs

    b = pl.program_id(1)

    @pl.when(b == 0)
    def _init():
        acc_ref[...] = jnp.zeros_like(acc_ref)

    def _fold(q):
        # (ROWS_PER_ITER, LANES) -> (SUB, LANES) via static 8-row slices (VALU adds only;
        # the cross-sublane / cross-lane reduce is deferred to the wrapper).
        acc = q[0:SUB]
        for k in range(1, ROWS_PER_ITER // SUB):
            acc = acc + q[k * SUB:(k + 1) * SUB]
        return acc

    def body(r, carry):
        pos_s, neg_s, bcep_s, bcen_s, inter_s, sig_s, tgt_s = carry
        row = pl.multiple_of(r * ROWS_PER_ITER, ROWS_PER_ITER)

        # Load each input slice from VMEM exactly once; upcast to f32 in-register.
        xb = xb_ref[pl.ds(row, ROWS_PER_ITER), :].astype(jnp.float32)
        t = t_ref[pl.ds(row, ROWS_PER_ITER), :].astype(jnp.float32)

        # Exact 0/1 compares keep fidelity with the PyTorch module even for soft targets
        # (non-binary targets get BCE weight 0).
        pos = (t == 1.0).astype(jnp.float32)
        neg = (t == 0.0).astype(jnp.float32)

        # Numerically stable BCE-with-logits: max(x, 0) - x*t + log1p(exp(-|x|)).
        e_b = jnp.exp(-jnp.abs(xb))
        bce = jnp.maximum(xb, 0.0) - xb * t + jnp.log1p(e_b)

        if shared_logits:
            # Dice sigmoid reuses exp(-|x|) from the BCE term (same logits stream).
            inv = pl.reciprocal(1.0 + e_b, approx=False)
            sig = jnp.where(xb >= 0.0, inv, e_b * inv)
        else:
            # Dice branch reads NCHW logits; tanh form = 1 transcendental / element.
            xd = xd_ref[pl.ds(row, ROWS_PER_ITER), :].astype(jnp.float32)
            sig = 0.5 * jnp.tanh(0.5 * xd) + 0.5

        return (pos_s + _fold(pos),
                neg_s + _fold(neg),
                bcep_s + _fold(bce * pos),
                bcen_s + _fold(bce * neg),
                inter_s + _fold(sig * t),
                sig_s + _fold(sig),
                tgt_s + _fold(t))

    zero = jnp.zeros((SUB, LANES), jnp.float32)
    sums = lax.fori_loop(0, block_rows // ROWS_PER_ITER, body, (zero,) * _NUM_SUMS)

    for i in range(_NUM_SUMS):
        acc_ref[i] += sums[i]

    @pl.when(b == pl.num_programs(1) - 1)
    def _flush():
        out_ref[...] = acc_ref[...]


def boundary_dice_loss(prediction, target, bce_weight=20.0, smooth=1.0):
    n, c, h, w = prediction.shape
    num_elements = n * c * h * w
    shared_logits = (c == 1)   # NHWC flatten == NCHW flatten -> stream logits only once

    if target.dtype == jnp.bool_:
        target = target.astype(jnp.int8)   # keep the stream narrow; upcast in-kernel

    tgt_flat = target.reshape(-1)
    if shared_logits:
        streams = [prediction.reshape(-1), tgt_flat]
        pad_vals = [PAD_LOGIT, 0]
    else:
        # Faithful to the PyTorch module: BCE pairs NHWC-flattened logits with the
        # NCHW-flattened target; Dice pairs NCHW-flattened logits with the same target.
        # TODO(synk): avoid materializing the NHWC copy in HBM (allow_input_fusion or an
        # in-kernel (C, HW) transpose) so the C>1 path reads logits from HBM only once.
        streams = [
            jnp.transpose(prediction, (0, 2, 3, 1)).reshape(-1),
            prediction.reshape(-1),
            tgt_flat,
        ]
        pad_vals = [PAD_LOGIT, PAD_LOGIT, 0]

    # Tiling: lane-dense (rows, 128); blocks of up to MAX_BLOCK_ROWS rows; block count a
    # multiple of NUM_PARALLEL_CHUNKS so both v7x cores get equal work; block_rows a
    # multiple of 32 so 8-/16-/32-bit native-dtype tiles all stay aligned.
    p_chunks = NUM_PARALLEL_CHUNKS
    rows = _cdiv(num_elements, LANES)
    num_blocks = max(p_chunks, _round_up(_cdiv(rows, MAX_BLOCK_ROWS), p_chunks))
    block_rows = _round_up(_cdiv(rows, num_blocks), ROWS_PER_ITER)
    padded_rows = num_blocks * block_rows
    blocks_per_chunk = num_blocks // p_chunks
    pad_elems = padded_rows * LANES - num_elements

    def to_tiles(v, pad_value):
        if pad_elems:
            # Fuses with the (layout-changing) flatten producer; padded logits are inert
            # (see PAD_LOGIT) and padded targets are 0, corrected in the finalize below.
            v = jnp.pad(v, (0, pad_elems), constant_values=pad_value)
        return v.reshape(padded_rows, LANES)

    tiled = [to_tiles(v, pv) for v, pv in zip(streams, pad_vals)]

    in_spec = pl.BlockSpec(
        (block_rows, LANES), lambda p, b: (p * blocks_per_chunk + b, 0))
    out_spec = pl.BlockSpec(
        (None, _NUM_SUMS, SUB, LANES), lambda p, b: (p, 0, 0, 0))

    kernel = functools.partial(
        _partial_sums_kernel, shared_logits=shared_logits, block_rows=block_rows)

    # Explicit scoped-VMEM budget: double-buffered native-dtype input blocks + the
    # accumulator/output slabs + headroom.  Keeps double-buffering intact on v5e's
    # 16 MiB scoped default and well inside v7x's 64 MiB physical VMEM.
    in_buf_bytes = sum(
        2 * block_rows * LANES * jnp.dtype(s.dtype).itemsize for s in tiled)
    slab_bytes = 4 * _NUM_SUMS * SUB * LANES * 4
    vmem_limit = int(min(max(in_buf_bytes + slab_bytes + (4 << 20), 16 << 20), 48 << 20))

    elems = padded_rows * LANES
    cost = pl.CostEstimate(
        flops=30 * elems,
        transcendentals=3 * elems,
        bytes_accessed=sum(int(s.size) * jnp.dtype(s.dtype).itemsize for s in tiled)
        + p_chunks * _NUM_SUMS * SUB * LANES * 4,
    )

    partials = pl.pallas_call(
        kernel,
        out_shape=jax.ShapeDtypeStruct((p_chunks, _NUM_SUMS, SUB, LANES), jnp.float32),
        grid_spec=pltpu.PrefetchScalarGridSpec(
            num_scalar_prefetch=0,
            grid=(p_chunks, blocks_per_chunk),
            in_specs=[in_spec] * len(tiled),
            out_specs=out_spec,
            scratch_shapes=[pltpu.VMEM((_NUM_SUMS, SUB, LANES), jnp.float32)],
        ),
        compiler_params=pltpu.CompilerParams(
            dimension_semantics=("parallel", "arbitrary"),
            vmem_limit_bytes=vmem_limit,
        ),
        cost_estimate=cost,
    )(*tiled)

    # Combine per-chunk partials + finalize (tiny scalar math) in plain JAX.
    s = jnp.sum(partials, axis=(0, 2, 3))
    pos_count = s[_POS]
    neg_count = s[_NEG] - jnp.float32(pad_elems)      # padding streams target == 0
    total = pos_count + neg_count
    bce_sum = (neg_count / total) * s[_BCE_POS] + (pos_count / total) * s[_BCE_NEG]
    bce_mean = bce_sum / jnp.float32(num_elements)    # reduction='mean' over all elements
    dice_score = (2.0 * s[_INTER] + smooth) / (s[_SIG_SUM] + s[_TGT_SUM] + smooth)
    return bce_weight * bce_mean + (1.0 - dice_score)


def _reference_loss(prediction, target, bce_weight=20.0, smooth=1.0):
    # Pure-JAX mirror of the PyTorch module, for verification.
    logit = jnp.transpose(prediction, (0, 2, 3, 1)).reshape(-1)
    t = target.reshape(-1)
    pos = (t == 1).astype(jnp.float32)
    neg = (t == 0).astype(jnp.float32)
    pos_count = pos.sum()
    neg_count = neg.sum()
    total = pos_count + neg_count
    weight = pos * (neg_count / total) + neg * (pos_count / total)
    bce_el = jnp.maximum(logit, 0.0) - logit * t + jnp.log1p(jnp.exp(-jnp.abs(logit)))
    bce = (weight * bce_el).mean()
    pred = jax.nn.sigmoid(prediction.reshape(-1))
    inter = (pred * t).sum()
    dice = (2.0 * inter + smooth) / (pred.sum() + t.sum() + smooth)
    return bce_weight * bce + (1.0 - dice)


if __name__ == "__main__":
    key = jax.random.PRNGKey(0)
    k1, k2, k3, k4 = jax.random.split(key, 4)

    # C == 1 (typical boundary-prediction shape): shared-logits fast path (2 streams).
    pred1 = jax.random.normal(k1, (2, 1, 16, 16), dtype=jnp.float32)
    tgt1 = jax.random.bernoulli(k2, 0.3, (2, 1, 16, 16)).astype(jnp.float32)
    loss1 = jax.block_until_ready(boundary_dice_loss(pred1, tgt1))
    ref1 = _reference_loss(pred1, tgt1)
    assert np.allclose(np.asarray(loss1), np.asarray(ref1), rtol=1e-4, atol=1e-5), (loss1, ref1)

    # C > 1 exercises the dual-stream (NHWC-BCE / NCHW-Dice) path, mirroring the
    # PyTorch module's pairing exactly.
    pred2 = jax.random.normal(k3, (2, 4, 16, 16), dtype=jnp.float32)
    tgt2 = jax.random.bernoulli(k4, 0.3, (2, 4, 16, 16)).astype(jnp.float32)
    loss2 = jax.block_until_ready(boundary_dice_loss(pred2, tgt2))
    ref2 = _reference_loss(pred2, tgt2)
    assert np.allclose(np.asarray(loss2), np.asarray(ref2), rtol=1e-4, atol=1e-5), (loss2, ref2)

    print("KERNEL_OK")
</pallas_src>

<mosaic_0001>
module attributes {stable_mosaic.version = 11 : i64} {
  func.func @_partial_sums_kernel(%arg0: i32, %arg1: i32, %arg2: memref<32x128xf32, #tpu.memory_space<vmem>>, %arg3: memref<32x128xf32, #tpu.memory_space<vmem>>, %arg4: memref<1x7x8x128xf32, #tpu.memory_space<vmem>>, %arg5: memref<7x8x128xf32, #tpu.memory_space<vmem>>) attributes {dimension_semantics = [#tpu.dimension_semantics<parallel>, #tpu.dimension_semantics<arbitrary>], iteration_bounds = array<i64: 2, 1>, scalar_prefetch = 0 : i64, scratch_operands = 1 : i64, tpu.core_type = #tpu.core_type<tc>, window_params = [{transform_indices = @transform_0, window_bounds = array<i64: 32, 128>}, {transform_indices = @transform_1, window_bounds = array<i64: 32, 128>}, {transform_indices = @transform_2, window_bounds = array<i64: 1, 7, 8, 128>}]} {
    %c0_i32 = arith.constant 0 : i32
    %0 = arith.cmpi eq, %arg1, %c0_i32 : i32
    %1 = arith.extui %0 : i1 to i32
    %c0_i32_0 = arith.constant 0 : i32
    %2 = arith.cmpi ne, %1, %c0_i32_0 : i32
    scf.if %2 {
      %cst_47 = arith.constant 0.000000e+00 : f32
      %139 = vector.broadcast %cst_47 : f32 to vector<7x8x128xf32>
      %c0_48 = arith.constant 0 : index
      %c0_49 = arith.constant 0 : index
      %c0_50 = arith.constant 0 : index
      %140 = vector.load %arg5[%c0_48, %c0_49, %c0_50] : memref<7x8x128xf32, #tpu.memory_space<vmem>>, vector<7x8x128xf32>
      tpu.vector_store %arg5[%c0_48, %c0_49, %c0_50], %139 {strides = array<i32>} : memref<7x8x128xf32, #tpu.memory_space<vmem>>, vector<7x8x128xf32>,
    } else {
    }
    %cst = arith.constant 0.000000e+00 : f32
    %3 = vector.broadcast %cst : f32 to vector<8x128xf32>
    %c0_i32_1 = arith.constant 0 : i32
    %c32_i32 = arith.constant 32 : i32
    %4 = arith.muli %c0_i32_1, %c32_i32 : i32
    %5 = tpu.assume_multiple %4, 32 : i32
    %6 = arith.index_cast %5 : i32 to index
    %c0 = arith.constant 0 : index
    %7 = vector.load %arg2[%6, %c0] : memref<32x128xf32, #tpu.memory_space<vmem>>, vector<32x128xf32>
    %8 = arith.index_cast %5 : i32 to index
    %c0_2 = arith.constant 0 : index
    %9 = vector.load %arg3[%8, %c0_2] : memref<32x128xf32, #tpu.memory_space<vmem>>, vector<32x128xf32>
    %cst_3 = arith.constant 1.000000e+00 : f32
    %10 = vector.broadcast %cst_3 : f32 to vector<32x128xf32>
    %11 = arith.cmpf oeq, %9, %10 : vector<32x128xf32>
    %12 = arith.extui %11 : vector<32x128xi1> to vector<32x128xi32>
    %13 = arith.sitofp %12 : vector<32x128xi32> to vector<32x128xf32>
    %cst_4 = arith.constant 0.000000e+00 : f32
    %14 = vector.broadcast %cst_4 : f32 to vector<32x128xf32>
    %15 = arith.cmpf oeq, %9, %14 : vector<32x128xf32>
    %16 = arith.extui %15 : vector<32x128xi1> to vector<32x128xi32>
    %17 = arith.sitofp %16 : vector<32x128xi32> to vector<32x128xf32>
    %18 = math.absf %7 : vector<32x128xf32>
    %cst_5 = arith.constant 0.000000e+00 : f32
    %19 = vector.broadcast %cst_5 : f32 to vector<32x128xf32>
    %20 = arith.subf %19, %18 : vector<32x128xf32>
    %21 = math.exp %20 : vector<32x128xf32>
    %cst_6 = arith.constant 0.000000e+00 : f32
    %22 = vector.broadcast %cst_6 : f32 to vector<32x128xf32>
    %23 = arith.maximumf %7, %22 : vector<32x128xf32>
    %24 = arith.mulf %7, %9 : vector<32x128xf32>
    %25 = arith.subf %23, %24 : vector<32x128xf32>
    %26 = math.log1p %21 : vector<32x128xf32>
    %27 = arith.addf %25, %26 : vector<32x128xf32>
    %cst_7 = arith.constant 1.000000e+00 : f32
    %28 = vector.broadcast %cst_7 : f32 to vector<32x128xf32>
    %29 = arith.addf %28, %21 : vector<32x128xf32>
    %30 = tpu.reciprocal %29 : vector<32x128xf32> -> vector<32x128xf32>
    %cst_8 = arith.constant 0.000000e+00 : f32
    %31 = vector.broadcast %cst_8 : f32 to vector<32x128xf32>
    %32 = arith.cmpf oge, %7, %31 : vector<32x128xf32>
    %33 = arith.mulf %21, %30 : vector<32x128xf32>
    %34 = arith.select %32, %30, %33 : vector<32x128xi1>, vector<32x128xf32>
    %35 = vector.extract_strided_slice %13 {offsets = [0, 0], sizes = [8, 128], strides = [1, 1]} : vector<32x128xf32> to vector<8x128xf32>
    %36 = vector.extract_strided_slice %13 {offsets = [8, 0], sizes = [8, 128], strides = [1, 1]} : vector<32x128xf32> to vector<8x128xf32>
    %37 = arith.addf %35, %36 : vector<8x128xf32>
    %38 = vector.extract_strided_slice %13 {offsets = [16, 0], sizes = [8, 128], strides = [1, 1]} : vector<32x128xf32> to vector<8x128xf32>
    %39 = arith.addf %37, %38 : vector<8x128xf32>
    %40 = vector.extract_strided_slice %13 {offsets = [24, 0], sizes = [8, 128], strides = [1, 1]} : vector<32x128xf32> to vector<8x128xf32>
    %41 = arith.addf %39, %40 : vector<8x128xf32>
    %42 = arith.addf %3, %41 : vector<8x128xf32>
    %43 = vector.extract_strided_slice %17 {offsets = [0, 0], sizes = [8, 128], strides = [1, 1]} : vector<32x128xf32> to vector<8x128xf32>
    %44 = vector.extract_strided_slice %17 {offsets = [8, 0], sizes = [8, 128], strides = [1, 1]} : vector<32x128xf32> to vector<8x128xf32>
    %45 = arith.addf %43, %44 : vector<8x128xf32>
    %46 = vector.extract_strided_slice %17 {offsets = [16, 0], sizes = [8, 128], strides = [1, 1]} : vector<32x128xf32> to vector<8x128xf32>
    %47 = arith.addf %45, %46 : vector<8x128xf32>
    %48 = vector.extract_strided_slice %17 {offsets = [24, 0], sizes = [8, 128], strides = [1, 1]} : vector<32x128xf32> to vector<8x128xf32>
    %49 = arith.addf %47, %48 : vector<8x128xf32>
    %50 = arith.addf %3, %49 : vector<8x128xf32>
    %51 = arith.mulf %27, %13 : vector<32x128xf32>
    %52 = vector.extract_strided_slice %51 {offsets = [0, 0], sizes = [8, 128], strides = [1, 1]} : vector<32x128xf32> to vector<8x128xf32>
    %53 = vector.extract_strided_slice %51 {offsets = [8, 0], sizes = [8, 128], strides = [1, 1]} : vector<32x128xf32> to vector<8x128xf32>
    %54 = arith.addf %52, %53 : vector<8x128xf32>
    %55 = vector.extract_strided_slice %51 {offsets = [16, 0], sizes = [8, 128], strides = [1, 1]} : vector<32x128xf32> to vector<8x128xf32>
    %56 = arith.addf %54, %55 : vector<8x128xf32>
    %57 = vector.extract_strided_slice %51 {offsets = [24, 0], sizes = [8, 128], strides = [1, 1]} : vector<32x128xf32> to vector<8x128xf32>
    %58 = arith.addf %56, %57 : vector<8x128xf32>
    %59 = arith.addf %3, %58 : vector<8x128xf32>
    %60 = arith.mulf %27, %17 : vector<32x128xf32>
    %61 = vector.extract_strided_slice %60 {offsets = [0, 0], sizes = [8, 128], strides = [1, 1]} : vector<32x128xf32> to vector<8x128xf32>
    %62 = vector.extract_strided_slice %60 {offsets = [8, 0], sizes = [8, 128], strides = [1, 1]} : vector<32x128xf32> to vector<8x128xf32>
    %63 = arith.addf %61, %62 : vector<8x128xf32>
    %64 = vector.extract_strided_slice %60 {offsets = [16, 0], sizes = [8, 128], strides = [1, 1]} : vector<32x128xf32> to vector<8x128xf32>
    %65 = arith.addf %63, %64 : vector<8x128xf32>
    %66 = vector.extract_strided_slice %60 {offsets = [24, 0], sizes = [8, 128], strides = [1, 1]} : vector<32x128xf32> to vector<8x128xf32>
    %67 = arith.addf %65, %66 : vector<8x128xf32>
    %68 = arith.addf %3, %67 : vector<8x128xf32>
    %69 = arith.mulf %34, %9 : vector<32x128xf32>
    %70 = vector.extract_strided_slice %69 {offsets = [0, 0], sizes = [8, 128], strides = [1, 1]} : vector<32x128xf32> to vector<8x128xf32>
    %71 = vector.extract_strided_slice %69 {offsets = [8, 0], sizes = [8, 128], strides = [1, 1]} : vector<32x128xf32> to vector<8x128xf32>
    %72 = arith.addf %70, %71 : vector<8x128xf32>
    %73 = vector.extract_strided_slice %69 {offsets = [16, 0], sizes = [8, 128], strides = [1, 1]} : vector<32x128xf32> to vector<8x128xf32>
    %74 = arith.addf %72, %73 : vector<8x128xf32>
    %75 = vector.extract_strided_slice %69 {offsets = [24, 0], sizes = [8, 128], strides = [1, 1]} : vector<32x128xf32> to vector<8x128xf32>
    %76 = arith.addf %74, %75 : vector<8x128xf32>
    %77 = arith.addf %3, %76 : vector<8x128xf32>
    %78 = vector.extract_strided_slice %34 {offsets = [0, 0], sizes = [8, 128], strides = [1, 1]} : vector<32x128xf32> to vector<8x128xf32>
    %79 = vector.extract_strided_slice %34 {offsets = [8, 0], sizes = [8, 128], strides = [1, 1]} : vector<32x128xf32> to vector<8x128xf32>
    %80 = arith.addf %78, %79 : vector<8x128xf32>
    %81 = vector.extract_strided_slice %34 {offsets = [16, 0], sizes = [8, 128], strides = [1, 1]} : vector<32x128xf32> to vector<8x128xf32>
    %82 = arith.addf %80, %81 : vector<8x128xf32>
    %83 = vector.extract_strided_slice %34 {offsets = [24, 0], sizes = [8, 128], strides = [1, 1]} : vector<32x128xf32> to vector<8x128xf32>
    %84 = arith.addf %82, %83 : vector<8x128xf32>
    %85 = arith.addf %3, %84 : vector<8x128xf32>
    %86 = vector.extract_strided_slice %9 {offsets = [0, 0], sizes = [8, 128], strides = [1, 1]} : vector<32x128xf32> to vector<8x128xf32>
    %87 = vector.extract_strided_slice %9 {offsets = [8, 0], sizes = [8, 128], strides = [1, 1]} : vector<32x128xf32> to vector<8x128xf32>
    %88 = arith.addf %86, %87 : vector<8x128xf32>
    %89 = vector.extract_strided_slice %9 {offsets = [16, 0], sizes = [8, 128], strides = [1, 1]} : vector<32x128xf32> to vector<8x128xf32>
    %90 = arith.addf %88, %89 : vector<8x128xf32>
    %91 = vector.extract_strided_slice %9 {offsets = [24, 0], sizes = [8, 128], strides = [1, 1]} : vector<32x128xf32> to vector<8x128xf32>
    %92 = arith.addf %90, %91 : vector<8x128xf32>
    %93 = arith.addf %3, %92 : vector<8x128xf32>
    %c1_i32 = arith.constant 1 : i32
    %c0_9 = arith.constant 0 : index
    %c0_10 = arith.constant 0 : index
    %c0_11 = arith.constant 0 : index
    %94 = vector.load %arg5[%c0_9, %c0_10, %c0_11] : memref<7x8x128xf32, #tpu.memory_space<vmem>>, vector<1x8x128xf32>
    %95 = vector.shape_cast %94 : vector<1x8x128xf32> to vector<8x128xf32>
    %96 = arith.addf %95, %42 : vector<8x128xf32>
    %c0_12 = arith.constant 0 : index
    %c0_13 = arith.constant 0 : index
    %c0_14 = arith.constant 0 : index
    %97 = vector.load %arg5[%c0_12, %c0_13, %c0_14] : memref<7x8x128xf32, #tpu.memory_space<vmem>>, vector<1x8x128xf32>
    %98 = vector.shape_cast %97 : vector<1x8x128xf32> to vector<8x128xf32>
    %99 = vector.shape_cast %96 : vector<8x128xf32> to vector<1x8x128xf32>
    tpu.vector_store %arg5[%c0_12, %c0_13, %c0_14], %99 {strides = array<i32>} : memref<7x8x128xf32, #tpu.memory_space<vmem>>, vector<1x8x128xf32>,
    %c1 = arith.constant 1 : index
    %c0_15 = arith.constant 0 : index
    %c0_16 = arith.constant 0 : index
    %100 = vector.load %arg5[%c1, %c0_15, %c0_16] : memref<7x8x128xf32, #tpu.memory_space<vmem>>, vector<1x8x128xf32>
    %101 = vector.shape_cast %100 : vector<1x8x128xf32> to vector<8x128xf32>
    %102 = arith.addf %101, %50 : vector<8x128xf32>
    %c1_17 = arith.constant 1 : index
    %c0_18 = arith.constant 0 : index
    %c0_19 = arith.constant 0 : index
    %103 = vector.load %arg5[%c1_17, %c0_18, %c0_19] : memref<7x8x128xf32, #tpu.memory_space<vmem>>, vector<1x8x128xf32>
    %104 = vector.shape_cast %103 : vector<1x8x128xf32> to vector<8x128xf32>
    %105 = vector.shape_cast %102 : vector<8x128xf32> to vector<1x8x128xf32>
    tpu.vector_store %arg5[%c1_17, %c0_18, %c0_19], %105 {strides = array<i32>} : memref<7x8x128xf32, #tpu.memory_space<vmem>>, vector<1x8x128xf32>,
    %c2 = arith.constant 2 : index
    %c0_20 = arith.constant 0 : index
    %c0_21 = arith.constant 0 : index
    %106 = vector.load %arg5[%c2, %c0_20, %c0_21] : memref<7x8x128xf32, #tpu.memory_space<vmem>>, vector<1x8x128xf32>
    %107 = vector.shape_cast %106 : vector<1x8x128xf32> to vector<8x128xf32>
    %108 = arith.addf %107, %59 : vector<8x128xf32>
    %c2_22 = arith.constant 2 : index
    %c0_23 = arith.constant 0 : index
    %c0_24 = arith.constant 0 : index
    %109 = vector.load %arg5[%c2_22, %c0_23, %c0_24] : memref<7x8x128xf32, #tpu.memory_space<vmem>>, vector<1x8x128xf32>
    %110 = vector.shape_cast %109 : vector<1x8x128xf32> to vector<8x128xf32>
    %111 = vector.shape_cast %108 : vector<8x128xf32> to vector<1x8x128xf32>
    tpu.vector_store %arg5[%c2_22, %c0_23, %c0_24], %111 {strides = array<i32>} : memref<7x8x128xf32, #tpu.memory_space<vmem>>, vector<1x8x128xf32>,
    %c3 = arith.constant 3 : index
    %c0_25 = arith.constant 0 : index
    %c0_26 = arith.constant 0 : index
    %112 = vector.load %arg5[%c3, %c0_25, %c0_26] : memref<7x8x128xf32, #tpu.memory_space<vmem>>, vector<1x8x128xf32>
    %113 = vector.shape_cast %112 : vector<1x8x128xf32> to vector<8x128xf32>
    %114 = arith.addf %113, %68 : vector<8x128xf32>
    %c3_27 = arith.constant 3 : index
    %c0_28 = arith.constant 0 : index
    %c0_29 = arith.constant 0 : index
    %115 = vector.load %arg5[%c3_27, %c0_28, %c0_29] : memref<7x8x128xf32, #tpu.memory_space<vmem>>, vector<1x8x128xf32>
    %116 = vector.shape_cast %115 : vector<1x8x128xf32> to vector<8x128xf32>
    %117 = vector.shape_cast %114 : vector<8x128xf32> to vector<1x8x128xf32>
    tpu.vector_store %arg5[%c3_27, %c0_28, %c0_29], %117 {strides = array<i32>} : memref<7x8x128xf32, #tpu.memory_space<vmem>>, vector<1x8x128xf32>,
    %c4 = arith.constant 4 : index
    %c0_30 = arith.constant 0 : index
    %c0_31 = arith.constant 0 : index
    %118 = vector.load %arg5[%c4, %c0_30, %c0_31] : memref<7x8x128xf32, #tpu.memory_space<vmem>>, vector<1x8x128xf32>
    %119 = vector.shape_cast %118 : vector<1x8x128xf32> to vector<8x128xf32>
    %120 = arith.addf %119, %77 : vector<8x128xf32>
    %c4_32 = arith.constant 4 : index
    %c0_33 = arith.constant 0 : index
    %c0_34 = arith.constant 0 : index
    %121 = vector.load %arg5[%c4_32, %c0_33, %c0_34] : memref<7x8x128xf32, #tpu.memory_space<vmem>>, vector<1x8x128xf32>
    %122 = vector.shape_cast %121 : vector<1x8x128xf32> to vector<8x128xf32>
    %123 = vector.shape_cast %120 : vector<8x128xf32> to vector<1x8x128xf32>
    tpu.vector_store %arg5[%c4_32, %c0_33, %c0_34], %123 {strides = array<i32>} : memref<7x8x128xf32, #tpu.memory_space<vmem>>, vector<1x8x128xf32>,
    %c5 = arith.constant 5 : index
    %c0_35 = arith.constant 0 : index
    %c0_36 = arith.constant 0 : index
    %124 = vector.load %arg5[%c5, %c0_35, %c0_36] : memref<7x8x128xf32, #tpu.memory_space<vmem>>, vector<1x8x128xf32>
    %125 = vector.shape_cast %124 : vector<1x8x128xf32> to vector<8x128xf32>
    %126 = arith.addf %125, %85 : vector<8x128xf32>
    %c5_37 = arith.constant 5 : index
    %c0_38 = arith.constant 0 : index
    %c0_39 = arith.constant 0 : index
    %127 = vector.load %arg5[%c5_37, %c0_38, %c0_39] : memref<7x8x128xf32, #tpu.memory_space<vmem>>, vector<1x8x128xf32>
    %128 = vector.shape_cast %127 : vector<1x8x128xf32> to vector<8x128xf32>
    %129 = vector.shape_cast %126 : vector<8x128xf32> to vector<1x8x128xf32>
    tpu.vector_store %arg5[%c5_37, %c0_38, %c0_39], %129 {strides = array<i32>} : memref<7x8x128xf32, #tpu.memory_space<vmem>>, vector<1x8x128xf32>,
    %c6 = arith.constant 6 : index
    %c0_40 = arith.constant 0 : index
    %c0_41 = arith.constant 0 : index
    %130 = vector.load %arg5[%c6, %c0_40, %c0_41] : memref<7x8x128xf32, #tpu.memory_space<vmem>>, vector<1x8x128xf32>
    %131 = vector.shape_cast %130 : vector<1x8x128xf32> to vector<8x128xf32>
    %132 = arith.addf %131, %93 : vector<8x128xf32>
    %c6_42 = arith.constant 6 : index
    %c0_43 = arith.constant 0 : index
    %c0_44 = arith.constant 0 : index
    %133 = vector.load %arg5[%c6_42, %c0_43, %c0_44] : memref<7x8x128xf32, #tpu.memory_space<vmem>>, vector<1x8x128xf32>
    %134 = vector.shape_cast %133 : vector<1x8x128xf32> to vector<8x128xf32>
    %135 = vector.shape_cast %132 : vector<8x128xf32> to vector<1x8x128xf32>
    tpu.vector_store %arg5[%c6_42, %c0_43, %c0_44], %135 {strides = array<i32>} : memref<7x8x128xf32, #tpu.memory_space<vmem>>, vector<1x8x128xf32>,
    %c0_i32_45 = arith.constant 0 : i32
    %136 = arith.cmpi eq, %arg1, %c0_i32_45 : i32
    %137 = arith.extui %136 : i1 to i32
    %c0_i32_46 = arith.constant 0 : i32
    %138 = arith.cmpi ne, %137, %c0_i32_46 : i32
    scf.if %138 {
      %c0_47 = arith.constant 0 : index
      %c0_48 = arith.constant 0 : index
      %c0_49 = arith.constant 0 : index
      %139 = vector.load %arg5[%c0_47, %c0_48, %c0_49] : memref<7x8x128xf32, #tpu.memory_space<vmem>>, vector<7x8x128xf32>
      %c0_50 = arith.constant 0 : index
      %c0_51 = arith.constant 0 : index
      %c0_52 = arith.constant 0 : index
      %c0_53 = arith.constant 0 : index
      %140 = vector.load %arg4[%c0_50, %c0_51, %c0_52, %c0_53] : memref<1x7x8x128xf32, #tpu.memory_space<vmem>>, vector<1x7x8x128xf32>
      %141 = vector.shape_cast %140 : vector<1x7x8x128xf32> to vector<7x8x128xf32>
      %142 = vector.shape_cast %139 : vector<7x8x128xf32> to vector<1x7x8x128xf32>
      tpu.vector_store %arg4[%c0_50, %c0_51, %c0_52, %c0_53], %142 {strides = array<i32>} : memref<1x7x8x128xf32, #tpu.memory_space<vmem>>, vector<1x7x8x128xf32>,
    } else {
    }
    return
  }
  func.func @transform_0(%arg0: i32, %arg1: i32) -> (i32, i32) {
    %c1_i32 = arith.constant 1 : i32
    %0 = arith.muli %arg0, %c1_i32 : i32
    %1 = arith.addi %0, %arg1 : i32
    %c0_i32 = arith.constant 0 : i32
    %c0_i32_0 = arith.constant 0 : i32
    return %1, %c0_i32 : i32, i32
  }
  func.func @transform_1(%arg0: i32, %arg1: i32) -> (i32, i32) {
    %c1_i32 = arith.constant 1 : i32
    %0 = arith.muli %arg0, %c1_i32 : i32
    %1 = arith.addi %0, %arg1 : i32
    %c0_i32 = arith.constant 0 : i32
    %c0_i32_0 = arith.constant 0 : i32
    return %1, %c0_i32 : i32, i32
  }
  func.func @transform_2(%arg0: i32, %arg1: i32) -> (i32, i32, i32, i32) {
    %c0_i32 = arith.constant 0 : i32
    %c0_i32_0 = arith.constant 0 : i32
    %c0_i32_1 = arith.constant 0 : i32
    %c0_i32_2 = arith.constant 0 : i32
    return %arg0, %c0_i32, %c0_i32_0, %c0_i32_1 : i32, i32, i32, i32
  }
}

</mosaic_0001>

<llo_original>
// kernel: tpu_custom_call.1
$region0: #{tpu_custom_call.1}
  #allocation0 [shape = 'u32[]', space=smem, size = 0x4, offset = 0x4, fixed_abs, tag = 'smem constant byte address 0x4 - core index']
  #allocation1 [shape = 'u32[144,128]{1,0:T(1,128)}', space=vmem, size = 0x12000, scoped, tag = 'internal scratch']
  #allocation2 [shape = 'f32[7,8,128]{2,1,0:T(8,128)}', space=vmem, size = 0x7000, scoped, tag = 'scratch operand']
  %s0 = inlined_call_operand.hbm [shape: f32[64,128], index: 0, kind: input, shape index: {}]
  %s1 = inlined_call_operand.hbm [shape: f32[64,128], index: 1, kind: input, shape index: {}]
  %s2 = inlined_call_operand.hbm [shape: f32[2,7,8,128], index: 2, kind: output, shape index: {}]
  %s3 = sld [smem:[#allocation0]]
  $region57: #{tpu_custom_call.1} parent=0
    _
  %s5 = ssub.s32 1, %s3
  %s6 = scalar_select 0, %s5, %s3
  $region1: #{tpu_custom_call.1} parent=0
    #allocation3 [shape = 'u8[32768]{0}', space=vmem, size = 0x8000, scoped, tag = 'input window, operand 0']
    #allocation4 [shape = 's32[2]{0}', space=sflag, size = 0x8, scoped, tag = 'scoped memory for tpu_custom_call.1']
    #allocation5 [shape = 's32[2]{0}', space=sflag, size = 0x8, scoped, tag = 'scoped memory for tpu_custom_call.1']
    #allocation6 [shape = 'u8[32768]{0}', space=vmem, size = 0x8000, scoped, tag = 'input window, operand 1']
    #allocation7 [shape = 's32[2]{0}', space=sflag, size = 0x8, scoped, tag = 'scoped memory for tpu_custom_call.1']
    #allocation8 [shape = 'u8[57344]{0}', space=vmem, size = 0xe000, scoped, tag = 'output window, operand 0']
    %7 = vsyncpa [#allocation4], 0
    %s8 = scalar_lea.sflag [#allocation4], 1
    %9 = vsyncpa %s8, 0
    %10 = vsyncpa [#allocation7], 0
    %s11 = scalar_lea.sflag [#allocation7], 1
    %12 = vsyncpa %s11, 0
    %13 = vsyncpa [#allocation5], 0
    %s14 = scalar_lea.sflag [#allocation5], 1
    %15 = vsyncpa %s14, 0
    loop: start=0, step=1, limit=4
    $region2: #{tpu_custom_call.1} parent=1 // loop_pre_header
      _
    $region3: #{tpu_custom_call.1} parent=1 // loop_header
      %s17 = sphi 0, %s21
      %p18 = scmp.ge.s32.totalorder %s17, 4
      %s24 = sphi 0, %s36
      %s25 = sphi 0, %s32
      %s26 = sphi 0, %s24
      %s27 = sphi 0, %s25
      %s28 = sphi 0, %s26
      %s29 = sphi 0, %s27
      %s41 = sphi 0, %s43
      %s44 = sphi 0, %s41
      %s45 = sphi 0, %s44
      %s61 = sphi 0, %s45
      %s69 = sphi 0, %s71
      %s72 = sphi 0, %s69
      %s73 = sphi 0, %s72
      %s89 = sphi 0, %s73
      %s95 = sphi 0, %s97
      %s98 = sphi 0, %s95
      %s99 = sphi 0, %s98
      %s115 = sphi 0, %s99
    $region4: #{tpu_custom_call.1} parent=1 // loop_header_branch
      %20 = sbr.rel (%p18) target = $region8
    $region5: #{tpu_custom_call.1} parent=1 // loop_body
      %s22 = ssub.s32 %s17, 1
      %s23 = ssub.s32 %s17, 2
      %s30 = sadd.s32 1, %s25
      %p31 = scmp.ge.s32.totalorder %s30, 1
      %s32 = scalar_select %p31, 0, %s30
      %s33 = sadd.s32 1, %s24
      %s34 = scalar_select %p31, %s33, %s24
      %p35 = scmp.ge.s32.totalorder %s34, 2
      %s36 = scalar_select %p35, 0, %s34
      %s37 = sadd.s32 %s24, %s25
      %s38 = sadd.s32 %s36, %s32
      %s39 = ssub.s32 %s37, %s38
      %p40 = scmp.eq.s32.totalorder %s39, 0
      %s42 = sadd.s32 %s41, 1
      %s43 = scalar_select %p40, %s41, %s42
      %p46 = pneg %p40
      %p47 = scmp.eq.s32.totalorder %s17, 1
      %p48 = por %p46, %p47
      %p49 = scmp.ne.s32.totalorder %s41, %s44
      %p50 = scmp.eq.s32.totalorder %s17, 0
      %p51 = por %p49, %p50
      %p52 = scmp.ne.s32.totalorder %s41, %s44
      %p53 = scmp.eq.s32.totalorder %s22, 1
      %p54 = por %p52, %p53
      %p55 = scmp.ne.s32.totalorder %s44, %s45
      %p56 = scmp.eq.s32.totalorder %s22, 0
      %p57 = por %p55, %p56
      %p58 = scmp.ne.s32.totalorder %s44, %s45
      %p59 = scmp.eq.s32.totalorder %s23, 1
      %p60 = por %p58, %p59
      %p62 = scmp.ne.s32.totalorder %s45, %s61
      %p63 = scmp.eq.s32.totalorder %s23, 0
      %p64 = por %p62, %p63
      %s65 = sadd.s32 %s24, %s25
      %s66 = sadd.s32 %s36, %s32
      %s67 = ssub.s32 %s65, %s66
      %p68 = scmp.eq.s32.totalorder %s67, 0
      %s70 = sadd.s32 %s69, 1
      %s71 = scalar_select %p68, %s69, %s70
      %p74 = pneg %p68
      %p75 = scmp.eq.s32.totalorder %s17, 1
      %p76 = por %p74, %p75
      %p77 = scmp.ne.s32.totalorder %s69, %s72
      %p78 = scmp.eq.s32.totalorder %s17, 0
      %p79 = por %p77, %p78
      %p80 = scmp.ne.s32.totalorder %s69, %s72
      %p81 = scmp.eq.s32.totalorder %s22, 1
      %p82 = por %p80, %p81
      %p83 = scmp.ne.s32.totalorder %s72, %s73
      %p84 = scmp.eq.s32.totalorder %s22, 0
      %p85 = por %p83, %p84
      %p86 = scmp.ne.s32.totalorder %s72, %s73
      %p87 = scmp.eq.s32.totalorder %s23, 1
      %p88 = por %p86, %p87
      %p90 = scmp.ne.s32.totalorder %s73, %s89
      %p91 = scmp.eq.s32.totalorder %s23, 0
      %p92 = por %p90, %p91
      %s93 = ssub.s32 %s24, %s36
      %p94 = scmp.eq.s32.totalorder %s93, 0
      %s96 = sadd.s32 %s95, 1
      %s97 = scalar_select %p94, %s95, %s96
      %p100 = pneg %p94
      %p101 = scmp.eq.s32.totalorder %s17, 1
      %p102 = por %p100, %p101
      %p103 = scmp.ne.s32.totalorder %s95, %s98
      %p104 = scmp.eq.s32.totalorder %s17, 0
      %p105 = por %p103, %p104
      %p106 = scmp.ne.s32.totalorder %s95, %s98
      %p107 = scmp.eq.s32.totalorder %s22, 1
      %p108 = por %p106, %p107
      %p109 = scmp.ne.s32.totalorder %s98, %s99
      %p110 = scmp.eq.s32.totalorder %s22, 0
      %p111 = por %p109, %p110
      %p112 = scmp.ne.s32.totalorder %s98, %s99
      %p113 = scmp.eq.s32.totalorder %s23, 1
      %p114 = por %p112, %p113
      %p116 = scmp.ne.s32.totalorder %s99, %s115
      %p117 = scmp.eq.s32.totalorder %s23, 0
      %p118 = por %p116, %p117
      %p119 = scmp.le.s32.totalorder 1, %s17
      %p120 = scmp.lt.s32.totalorder %s17, 3
      %p121 = pnand %p119, %p120
      %p122 = pneg %p121
      // Predicated region
      $region9: #{tpu_custom_call.1} parent=5 // pred_check
        _
      $region10: #{tpu_custom_call.1} parent=5 // pred_check_branch
        %124 = sbr.rel (%p121) target = $region12
      $region11: #{tpu_custom_call.1} parent=5 // pred_region
        %s125 = ssub.s32 %s17, 1
      $region12: #{tpu_custom_call.1} parent=5 // pred_fallthru
        _
      %p126 = scmp.lt.s32.totalorder %s17, 2
      // Predicated region
      $region13: #{tpu_custom_call.1} parent=5 // pred_check
        %p127 = pneg %p126
      $region14: #{tpu_custom_call.1} parent=5 // pred_check_branch
        %129 = sbr.rel (%p127) target = $region16
      $region15: #{tpu_custom_call.1} parent=5 // pred_region
        // Predicated region
        $region17: #{tpu_custom_call.1} parent=15 // pred_check
          %p130 = pneg %p51
        $region18: #{tpu_custom_call.1} parent=15 // pred_check_branch
          %132 = sbr.rel (%p130) target = $region20
        $region19: #{tpu_custom_call.1} parent=15 // pred_region
          %s133 = sand.u32 %s41, 1
          %s134 = scalar_lea.sflag [#allocation4], %s133
          %s135 = sand.u32 %s41, 1
          %s136 = smul.addr %s135, 32
          %s137 = scalar_lea.vmem [#allocation3], %s136
          %s138 = sadd.s32 %s24, %s25
          %s139 = smul.u32 4, %s138
          %s141 = ssub.s32 512, 512
          %142 = vsyncadd %s134, %s141
          %s143 = smul.addr %s139, 128
          %s144 = scalar_lea.hbm %s0, %s143
          %s145 = sshll.u32 %s137, 4
          %s146 = int_to_ptr.vmem [resolvable:$true] %s145
          %151 = dma.hbm_to_vmem [thread:$0]  %s144, 512, %s146, %s134, 128, 128, 8
        $region20: #{tpu_custom_call.1} parent=15 // pred_fallthru
          _
        // Predicated region
        $region21: #{tpu_custom_call.1} parent=15 // pred_check
          %p152 = pneg %p79
        $region22: #{tpu_custom_call.1} parent=15 // pred_check_branch
          %154 = sbr.rel (%p152) target = $region24
        $region23: #{tpu_custom_call.1} parent=15 // pred_region
          %s155 = sand.u32 %s69, 1
          %s156 = scalar_lea.sflag [#allocation7], %s155
          %s157 = sand.u32 %s69, 1
          %s158 = smul.addr %s157, 32
          %s159 = scalar_lea.vmem [#allocation6], %s158
          %s160 = sadd.s32 %s24, %s25
          %s161 = smul.u32 4, %s160
          %s163 = ssub.s32 512, 512
          %164 = vsyncadd %s156, %s163
          %s165 = smul.addr %s161, 128
          %s166 = scalar_lea.hbm %s1, %s165
          %s167 = sshll.u32 %s159, 4
          %s168 = int_to_ptr.vmem [resolvable:$true] %s167
          %173 = dma.hbm_to_vmem [thread:$0]  %s166, 512, %s168, %s156, 128, 128, 8
        $region24: #{tpu_custom_call.1} parent=15 // pred_fallthru
          _
      $region16: #{tpu_custom_call.1} parent=5 // pred_fallthru
        _
      %p174 = scmp.le.s32.totalorder 1, %s17
      %p175 = scmp.lt.s32.totalorder %s17, 3
      %p176 = pnand %p174, %p175
      %p177 = pneg %p176
      // Predicated region
      $region25: #{tpu_custom_call.1} parent=5 // pred_check
        _
      $region26: #{tpu_custom_call.1} parent=5 // pred_check_branch
        %179 = sbr.rel (%p176) target = $region28
      $region27: #{tpu_custom_call.1} parent=5 // pred_region
        %s180 = ssub.s32 %s17, 1
        %s181 = sand.u32 %s44, 1
        %s182 = scalar_lea.sflag [#allocation4], %s181
        %s183 = sand.u32 %s44, 1
        %s184 = smul.addr %s183, 32
        %s185 = scalar_lea.vmem [#allocation3], %s184
        // Predicated region
        $region29: #{tpu_custom_call.1} parent=27 // pred_check
          %p186 = pneg %p57
        $region30: #{tpu_custom_call.1} parent=27 // pred_check_branch
          %188 = sbr.rel (%p186) target = $region32
        $region31: #{tpu_custom_call.1} parent=27 // pred_region
          %189 = dma.done %s182, 512
        $region32: #{tpu_custom_call.1} parent=27 // pred_fallthru
          _
        %s190 = sand.u32 %s72, 1
        %s191 = scalar_lea.sflag [#allocation7], %s190
        %s192 = sand.u32 %s72, 1
        %s193 = smul.addr %s192, 32
        %s194 = scalar_lea.vmem [#allocation6], %s193
        // Predicated region
        $region33: #{tpu_custom_call.1} parent=27 // pred_check
          %p195 = pneg %p85
        $region34: #{tpu_custom_call.1} parent=27 // pred_check_branch
          %197 = sbr.rel (%p195) target = $region36
        $region35: #{tpu_custom_call.1} parent=27 // pred_region
          %198 = dma.done %s191, 512
        $region36: #{tpu_custom_call.1} parent=27 // pred_fallthru
          _
        %s199 = sand.u32 %s44, 1
        %s200 = scalar_lea.sflag [#allocation4], %s199
        %s201 = sand.u32 %s44, 1
        %s202 = smul.addr %s201, 32
        %s203 = scalar_lea.vmem [#allocation3], %s202
        %p204 = pneg %p57
        %p205 = pneg %p54
        %s206 = sand.u32 %s72, 1
        %s207 = scalar_lea.sflag [#allocation7], %s206
        %s208 = sand.u32 %s72, 1
        %s209 = smul.addr %s208, 32
        %s210 = scalar_lea.vmem [#allocation6], %s209
        %p211 = pneg %p85
        %p212 = pneg %p82
        %p213 = pneg %p111
        %p214 = pneg %p108
        %s215 = sand.u32 %s98, 1
        %s216 = scalar_lea.sflag [#allocation5], %s215
        %s217 = sand.u32 %s98, 1
        %s218 = smul.addr %s217, 56
        %s219 = scalar_lea.vmem [#allocation8], %s218
        %s220 = sadd.s32 %s26, %s27
        %s221 = smul.u32 4, %s220
        %s222 = sadd.s32 %s26, %s27
        %s223 = smul.u32 4, %s222
        %p224 = scmp.eq.s32.totalorder %s27, 0
        // Predicated region
        $region37: #{tpu_custom_call.1} parent=27 // pred_check
          %p225 = pneg %p224
        $region38: #{tpu_custom_call.1} parent=27 // pred_check_branch
          %227 = sbr.rel (%p225) target = $region40
        $region39: #{tpu_custom_call.1} parent=27 // pred_region
          %228 = vst [vmem:[#allocation2] sm:$0xff] 0.0
          %229 = vst [vmem:[#allocation2 + $0x8] sm:$0xff] 0.0
          %230 = vst [vmem:[#allocation2 + $0x10] sm:$0xff] 0.0
          %231 = vst [vmem:[#allocation2 + $0x18] sm:$0xff] 0.0
          %232 = vst [vmem:[#allocation2 + $0x20] sm:$0xff] 0.0
          %233 = vst [vmem:[#allocation2 + $0x28] sm:$0xff] 0.0
          %234 = vst [vmem:[#allocation2 + $0x30] sm:$0xff] 0.0
        $region40: #{tpu_custom_call.1} parent=27 // pred_fallthru
          _
        %v235 = vld [vmem:[%s185] sm:$0xff]
        %v236 = vld [vmem:[%s185 + $0x8] sm:$0xff]
        %v237 = vld [vmem:[%s185 + $0x10] sm:$0xff]
        %v238 = vld [vmem:[%s185 + $0x18] sm:$0xff]
        %v239 = vld [vmem:[%s194] sm:$0xff]
        %v240 = vld [vmem:[%s194 + $0x8] sm:$0xff]
        %v241 = vld [vmem:[%s194 + $0x10] sm:$0xff]
        %v242 = vld [vmem:[%s194 + $0x18] sm:$0xff]
        %vm243 = vcmp.eq.f32.partialorder %v239, 1.0
        %vm244 = vcmp.eq.f32.partialorder %v240, 1.0
        %vm245 = vcmp.eq.f32.partialorder %v241, 1.0
        %vm246 = vcmp.eq.f32.partialorder %v242, 1.0
        %v247 = vsel %vm243, 1, 0
        %v248 = vsel %vm244, 1, 0
        %v249 = vsel %vm245, 1, 0
        %v250 = vsel %vm246, 1, 0
        %v251 = vcvt.s32.f32 %v247
        %v252 = vcvt.s32.f32 %v248
        %v253 = vcvt.s32.f32 %v249
        %v254 = vcvt.s32.f32 %v250
        %vm255 = vcmp.eq.f32.partialorder %v239, 0.0
        %vm256 = vcmp.eq.f32.partialorder %v240, 0.0
        %vm257 = vcmp.eq.f32.partialorder %v241, 0.0
        %vm258 = vcmp.eq.f32.partialorder %v242, 0.0
        %v259 = vsel %vm255, 1, 0
        %v260 = vsel %vm256, 1, 0
        %v261 = vsel %vm257, 1, 0
        %v262 = vsel %vm258, 1, 0
        %v263 = vcvt.s32.f32 %v259
        %v264 = vcvt.s32.f32 %v260
        %v265 = vcvt.s32.f32 %v261
        %v266 = vcvt.s32.f32 %v262
        %v267 = vand.u32 2147483647, %v235
        %v268 = vand.u32 2147483647, %v236
        %v269 = vand.u32 2147483647, %v237
        %v270 = vand.u32 2147483647, %v238
        %v271 = vsub.f32 0.0, %v267
        %v272 = vsub.f32 0.0, %v268
        %v273 = vsub.f32 0.0, %v269
        %v274 = vsub.f32 0.0, %v270
        %v275 = vmul.f32 %v271, 1.442695
        %v276 = vpow.pop %v275
        %v277 = vmul.f32 %v272, 1.442695
        %v278 = vpow.pop %v277
        %v279 = vmul.f32 %v273, 1.442695
        %v280 = vpow.pop %v279
        %v281 = vmul.f32 %v274, 1.442695
        %v282 = vpow.pop %v281
        %v283 = vmax.f32 %v235, 0.0
        %v284 = vmax.f32 %v236, 0.0
        %v285 = vmax.f32 %v237, 0.0
        %v286 = vmax.f32 %v238, 0.0
        %v287 = vmul.f32 %v235, %v239
        %v288 = vmul.f32 %v236, %v240
        %v289 = vmul.f32 %v237, %v241
        %v290 = vmul.f32 %v238, %v242
        %v291 = vsub.f32 %v283, %v287
        %v292 = vsub.f32 %v284, %v288
        %v293 = vsub.f32 %v285, %v289
        %v294 = vsub.f32 %v286, %v290
        %v295 = vadd.f32 %v276, 1.0
        %v296 = vlog2.pop %v295
        %v297 = vmul.f32 %v296, 0.6931472
        %v298 = vmul.f32 -0.5, %v276
        %v299 = vadd.f32 %v298, 1.0
        %v300 = vmul.f32 %v299, %v276
        %v301 = vand.u32 2147483647, %v276
        %vm302 = vcmp.lt.f32.partialorder %v301, 0.0004427343
        %v303 = vsel %vm302, %v300, %v297
        %v304 = vadd.f32 %v278, 1.0
        %v305 = vlog2.pop %v304
        %v306 = vmul.f32 %v305, 0.6931472
        %v307 = vmul.f32 -0.5, %v278
        %v308 = vadd.f32 %v307, 1.0
        %v309 = vmul.f32 %v308, %v278
        %v310 = vand.u32 2147483647, %v278
        %vm311 = vcmp.lt.f32.partialorder %v310, 0.0004427343
        %v312 = vsel %vm311, %v309, %v306
        %v313 = vadd.f32 %v280, 1.0
        %v314 = vlog2.pop %v313
        %v315 = vmul.f32 %v314, 0.6931472
        %v316 = vmul.f32 -0.5, %v280
        %v317 = vadd.f32 %v316, 1.0
        %v318 = vmul.f32 %v317, %v280
        %v319 = vand.u32 2147483647, %v280
        %vm320 = vcmp.lt.f32.partialorder %v319, 0.0004427343
        %v321 = vsel %vm320, %v318, %v315
        %v322 = vadd.f32 %v282, 1.0
        %v323 = vlog2.pop %v322
        %v324 = vmul.f32 %v323, 0.6931472
        %v325 = vmul.f32 -0.5, %v282
        %v326 = vadd.f32 %v325, 1.0
        %v327 = vmul.f32 %v326, %v282
        %v328 = vand.u32 2147483647, %v282
        %vm329 = vcmp.lt.f32.partialorder %v328, 0.0004427343
        %v330 = vsel %vm329, %v327, %v324
        %v331 = vadd.f32 %v291, %v303
        %v332 = vadd.f32 %v292, %v312
        %v333 = vadd.f32 %v293, %v321
        %v334 = vadd.f32 %v294, %v330
        %v335 = vadd.f32 %v276, 1.0
        %v336 = vadd.f32 %v278, 1.0
        %v337 = vadd.f32 %v280, 1.0
        %v338 = vadd.f32 %v282, 1.0
        %v339 = vrcp.pop %v335
        %v340 = vrcp.pop %v336
        %v341 = vrcp.pop %v337
        %v342 = vrcp.pop %v338
        %vm343 = vcmp.ge.f32.partialorder %v235, 0.0
        %vm344 = vcmp.ge.f32.partialorder %v236, 0.0
        %vm345 = vcmp.ge.f32.partialorder %v237, 0.0
        %vm346 = vcmp.ge.f32.partialorder %v238, 0.0
        %v347 = vmul.f32 %v276, %v339
        %v348 = vmul.f32 %v278, %v340
        %v349 = vmul.f32 %v280, %v341
        %v350 = vmul.f32 %v282, %v342
        %v351 = vsel %vm343, %v339, %v347
        %v352 = vsel %vm344, %v340, %v348
        %v353 = vsel %vm345, %v341, %v349
        %v354 = vsel %vm346, %v342, %v350
        %v355 = vadd.f32 %v251, %v252
        %v356 = vadd.f32 %v355, %v253
        %v357 = vadd.f32 %v356, %v254
        %v358 = vadd.f32 %v357, 0.0
        %v359 = vadd.f32 %v263, %v264
        %v360 = vadd.f32 %v359, %v265
        %v361 = vadd.f32 %v360, %v266
        %v362 = vadd.f32 %v361, 0.0
        %v363 = vmul.f32 %v331, %v251
        %v364 = vmul.f32 %v332, %v252
        %v365 = vmul.f32 %v333, %v253
        %v366 = vmul.f32 %v334, %v254
        %v367 = vadd.f32 %v363, %v364
        %v368 = vadd.f32 %v367, %v365
        %v369 = vadd.f32 %v368, %v366
        %v370 = vadd.f32 %v369, 0.0
        %v371 = vmul.f32 %v331, %v263
        %v372 = vmul.f32 %v332, %v264
        %v373 = vmul.f32 %v333, %v265
        %v374 = vmul.f32 %v334, %v266
        %v375 = vadd.f32 %v371, %v372
        %v376 = vadd.f32 %v375, %v373
        %v377 = vadd.f32 %v376, %v374
        %v378 = vadd.f32 %v377, 0.0
        %v379 = vmul.f32 %v351, %v239
        %v380 = vmul.f32 %v352, %v240
        %v381 = vmul.f32 %v353, %v241
        %v382 = vmul.f32 %v354, %v242
        %v383 = vadd.f32 %v379, %v380
        %v384 = vadd.f32 %v383, %v381
        %v385 = vadd.f32 %v384, %v382
        %v386 = vadd.f32 %v385, 0.0
        %v387 = vadd.f32 %v351, %v352
        %v388 = vadd.f32 %v387, %v353
        %v389 = vadd.f32 %v388, %v354
        %v390 = vadd.f32 %v389, 0.0
        %v391 = vadd.f32 %v239, %v240
        %v392 = vadd.f32 %v391, %v241
        %v393 = vadd.f32 %v392, %v242
        %v394 = vadd.f32 %v393, 0.0
        %v395 = vld [vmem:[#allocation2] sm:$0xff]
        %v396 = vadd.f32 %v395, %v358
        %397 = vst [vmem:[#allocation2] sm:$0xff] %v396
        %s398 = scalar_lea.vmem [#allocation2], 8
        %v399 = vld [vmem:[%s398] sm:$0xff]
        %v400 = vadd.f32 %v399, %v362
        %401 = vst [vmem:[%s398] sm:$0xff] %v400
        %s402 = scalar_lea.vmem [#allocation2], 16
        %v403 = vld [vmem:[%s402] sm:$0xff]
        %v404 = vadd.f32 %v403, %v370
        %405 = vst [vmem:[%s402] sm:$0xff] %v404
        %s406 = scalar_lea.vmem [#allocation2], 24
        %v407 = vld [vmem:[%s406] sm:$0xff]
        %v408 = vadd.f32 %v407, %v378
        %409 = vst [vmem:[%s406] sm:$0xff] %v408
        %s410 = scalar_lea.vmem [#allocation2], 32
        %v411 = vld [vmem:[%s410] sm:$0xff]
        %v412 = vadd.f32 %v411, %v386
        %413 = vst [vmem:[%s410] sm:$0xff] %v412
        %s414 = scalar_lea.vmem [#allocation2], 40
        %v415 = vld [vmem:[%s414] sm:$0xff]
        %v416 = vadd.f32 %v415, %v390
        %417 = vst [vmem:[%s414] sm:$0xff] %v416
        %s418 = scalar_lea.vmem [#allocation2], 48
        %v419 = vld [vmem:[%s418] sm:$0xff]
        %v420 = vadd.f32 %v419, %v394
        %421 = vst [vmem:[%s418] sm:$0xff] %v420
        // Predicated region
        $region41: #{tpu_custom_call.1} parent=27 // pred_check
          %p422 = pneg %p224
        $region42: #{tpu_custom_call.1} parent=27 // pred_check_branch
          %424 = sbr.rel (%p422) target = $region44
        $region43: #{tpu_custom_call.1} parent=27 // pred_region
          %v425 = vld [vmem:[#allocation2] sm:$0xff]
          %v426 = vld [vmem:[#allocation2 + $0x8] sm:$0xff]
          %v427 = vld [vmem:[#allocation2 + $0x10] sm:$0xff]
          %v428 = vld [vmem:[#allocation2 + $0x18] sm:$0xff]
          %v429 = vld [vmem:[#allocation2 + $0x20] sm:$0xff]
          %v430 = vld [vmem:[#allocation2 + $0x28] sm:$0xff]
          %v431 = vld [vmem:[#allocation2 + $0x30] sm:$0xff]
          %432 = vst [vmem:[%s219] sm:$0xff] %v425
          %433 = vst [vmem:[%s219 + $0x8] sm:$0xff] %v426
          %434 = vst [vmem:[%s219 + $0x10] sm:$0xff] %v427
          %435 = vst [vmem:[%s219 + $0x18] sm:$0xff] %v428
          %436 = vst [vmem:[%s219 + $0x20] sm:$0xff] %v429
          %437 = vst [vmem:[%s219 + $0x28] sm:$0xff] %v430
          %438 = vst [vmem:[%s219 + $0x30] sm:$0xff] %v431
        $region44: #{tpu_custom_call.1} parent=27 // pred_fallthru
          _
        %s439 = sand.u32 %s98, 1
        %s440 = scalar_lea.sflag [#allocation5], %s439
        %s441 = sand.u32 %s98, 1
        %s442 = smul.addr %s441, 56
        %s443 = scalar_lea.vmem [#allocation8], %s442
        // Predicated region
        $region45: #{tpu_custom_call.1} parent=27 // pred_check
          %p444 = pneg %p108
        $region46: #{tpu_custom_call.1} parent=27 // pred_check_branch
          %446 = sbr.rel (%p444) target = $region48
        $region47: #{tpu_custom_call.1} parent=27 // pred_region
          %s448 = ssub.s32 896, 896
          %449 = vsyncadd %s440, %s448
          %s450 = smul.addr %s26, 7
          %s451 = smul.addr %s450, 128
          %s452 = scalar_lea.hbm %s2, %s451
          %s453 = sshll.u32 %s443, 4
          %s454 = int_to_ptr.vmem [resolvable:$true] %s453
          %459 = dma.vmem_to_hbm [thread:$0]  %s454, 896, %s452, %s440, 128, 128, 8
        $region48: #{tpu_custom_call.1} parent=27 // pred_fallthru
          _
      $region28: #{tpu_custom_call.1} parent=5 // pred_fallthru
        _
      %p460 = scmp.le.s32.totalorder 2, %s17
      // Predicated region
      $region49: #{tpu_custom_call.1} parent=5 // pred_check
        %p461 = pneg %p460
      $region50: #{tpu_custom_call.1} parent=5 // pred_check_branch
        %463 = sbr.rel (%p461) target = $region52
      $region51: #{tpu_custom_call.1} parent=5 // pred_region
        %s464 = ssub.s32 %s17, 2
        // Predicated region
        $region53: #{tpu_custom_call.1} parent=51 // pred_check
          %p465 = pneg %p114
        $region54: #{tpu_custom_call.1} parent=51 // pred_check_branch
          %467 = sbr.rel (%p465) target = $region56
        $region55: #{tpu_custom_call.1} parent=51 // pred_region
          %s468 = sand.u32 %s99, 1
          %s469 = scalar_lea.sflag [#allocation5], %s468
          %s470 = sand.u32 %s99, 1
          %s471 = smul.addr %s470, 56
          %s472 = scalar_lea.vmem [#allocation8], %s471
          %473 = dma.done %s469, 896
        $region56: #{tpu_custom_call.1} parent=51 // pred_fallthru
          _
      $region52: #{tpu_custom_call.1} parent=5 // pred_fallthru
        _
    $region6: #{tpu_custom_call.1} parent=1 // loop_footer
      %s21 = sadd.s32 1, %s17
    $region7: #{tpu_custom_call.1} parent=1 // loop_footer_branch
      %16 = sbr.rel target = $region3
    $region8: #{tpu_custom_call.1} parent=1 // loop_exit
      _
    %474 = vsyncpa [#allocation4], 1
    %s475 = scalar_lea.sflag [#allocation4], 1
    %476 = vsyncpa %s475, 1
    %477 = vsyncpa [#allocation7], 1
    %s478 = scalar_lea.sflag [#allocation7], 1
    %479 = vsyncpa %s478, 1
    %480 = vsyncpa [#allocation5], 1
    %s481 = scalar_lea.sflag [#allocation5], 1
    %482 = vsyncpa %s481, 1

</llo_original>
